<compile_context>
chip_gen: v5e
topology: v5e:2x2
jax: 0.10.0
libtpu: 0.0.40
codegen_flags: <defaults>
</compile_context>

<pallas_src>
import jax
import jax.numpy as jnp
from jax import lax
from jax.experimental import pallas as pl
from jax.experimental.pallas import tpu as pltpu

LN_EPS = 1e-5
LANE = 128


def _round_up(x, m):
    return ((x + m - 1) // m) * m


def _physical_vmem_bytes():
    """Per-TensorCore VMEM capacity; conservative 64 MiB (v7x) fallback."""
    try:
        v = getattr(pltpu.get_tpu_info(), "vmem_capacity_bytes", None)
        if v:
            return int(v)
    except Exception:
        pass
    return 64 << 20


def _make_kernel(hid_real, hid_p, n_k, use_acc):
    inv_n = 1.0 / float(hid_real)
    need_mask = hid_p != hid_real

    def _epilogue(y, epi_ref, o_ref):
        # y: (tm, hid_p) f32; padded columns of y are exactly zero.
        y = y + epi_ref[0:1, :]                                  # + b2 (0 on pads)
        mean = jnp.sum(y, axis=-1, keepdims=True) * inv_n        # pads add 0
        c = y - mean
        if need_mask:                                            # zero padded cols
            lanes = lax.broadcasted_iota(jnp.int32, y.shape, 1)
            c = jnp.where(lanes < hid_real, c, 0.0)
        var = jnp.sum(c * c, axis=-1, keepdims=True) * inv_n     # two-pass variance
        y_norm = c * lax.rsqrt(var + LN_EPS)
        # gamma/beta zero-padded -> padded output columns are exact zeros.
        o_ref[...] = (y_norm * epi_ref[1:2, :] + epi_ref[2:3, :]).astype(o_ref.dtype)

    def _ffn(x_ref, w1_ref, b1_ref, w2_ref):
        # Feed the MXU in the weight dtype (bf16 weights -> bf16 inputs,
        # f32 accumulation).  No-op casts for f32 weights.
        x = x_ref[...].astype(w1_ref.dtype)
        h = jnp.dot(x, w1_ref[...], preferred_element_type=jnp.float32)
        h = jnp.maximum(h + b1_ref[...], 0.0)
        return jnp.dot(h.astype(w2_ref.dtype), w2_ref[...],
                       preferred_element_type=jnp.float32)

    if not use_acc:
        # Weights fully resident in VMEM; 1-D grid over row tiles.
        def kernel(x_ref, w1_ref, b1_ref, w2_ref, epi_ref, o_ref):
            _epilogue(_ffn(x_ref, w1_ref, b1_ref, w2_ref), epi_ref, o_ref)
        return kernel

    # Hidden-dim chunked path: grid = (rows, k), f32 accumulator in VMEM.
    def kernel(x_ref, w1_ref, b1_ref, w2_ref, epi_ref, o_ref, acc_ref):
        k = pl.program_id(1)

        @pl.when(k == 0)
        def _():
            acc_ref[...] = jnp.zeros_like(acc_ref)

        acc_ref[...] += _ffn(x_ref, w1_ref, b1_ref, w2_ref)

        @pl.when(k == n_k - 1)
        def _():
            _epilogue(acc_ref[...], epi_ref, o_ref)

    return kernel


def encoder_block(x, w1, b1, w2, b2, gamma, beta, *, tm=256):
    """x: (..., in_dim); w1: (in_dim, hid); w2: (hid, hid).  Returns (..., hid)."""
    in_dim = x.shape[-1]
    hid = w1.shape[1]
    lead = x.shape[:-1]
    x2d = x.reshape(-1, in_dim)
    M = x2d.shape[0]

    dsz = jnp.dtype(x.dtype).itemsize
    wsz = jnp.dtype(w1.dtype).itemsize

    in_p = _round_up(in_dim, LANE)
    hid_p = _round_up(hid, LANE)

    # ---- pad feature dims only when not already lane-aligned; never pad M.
    # TODO(synk): for repeated calls with unaligned dims, pre-pad the weights
    #             once outside this wrapper instead of per call.
    if in_p != in_dim:
        x2d = jnp.pad(x2d, ((0, 0), (0, in_p - in_dim)))
    if in_p != in_dim or hid_p != hid:
        w1 = jnp.pad(w1, ((0, in_p - in_dim), (0, hid_p - hid)))
    if hid_p != hid:
        w2 = jnp.pad(w2, ((0, hid_p - hid), (0, hid_p - hid)))
        b1 = jnp.pad(b1, (0, hid_p - hid))
        b2 = jnp.pad(b2, (0, hid_p - hid))
        gamma = jnp.pad(gamma, (0, hid_p - hid))   # zero-padded on purpose
        beta = jnp.pad(beta, (0, hid_p - hid))

    b1 = b1.astype(jnp.float32).reshape(1, hid_p)
    epi = jnp.stack([b2, gamma, beta]).astype(jnp.float32)      # (3, hid_p)

    phys_vmem = _physical_vmem_bytes()
    budget = phys_vmem - (8 << 20)                              # headroom

    # ---- row tile -----------------------------------------------------------
    row_align = 16 if dsz < 4 else 8
    tm0 = min(_round_up(tm, row_align), _round_up(M, row_align))
    # v7x megacore: aim for >= 4 row steps (2 per TensorCore) when possible.
    while tm0 > 128 and pl.cdiv(M, tm0) < 4:
        tm0 = max(128, _round_up(tm0 // 2, row_align))

    def plan(tm_e, single_resident):
        """Pick (tk, n_k) and estimate VMEM for a given row tile."""
        act = 2 * tm_e * in_p * dsz            # x tile (double buffered)
        act += 2 * tm_e * hid_p * dsz          # out tile (double buffered)
        act += tm_e * hid_p * 4                # f32 hidden intermediate
        w_full = (in_p + hid_p) * hid_p * wsz
        nbuf = 1 if single_resident else 2
        if nbuf * w_full + act <= budget:
            return hid_p, 1, nbuf * w_full + act
        act += tm_e * hid_p * 4                # f32 accumulator (chunked path)
        for tk in (4096, 2048, 1024, 512, 256, 128):
            if tk < hid_p and hid_p % tk == 0:
                need = 2 * (in_p + hid_p) * tk * wsz + act
                if need <= budget:
                    return tk, hid_p // tk, need
        tk = 128
        return tk, hid_p // tk, 2 * (in_p + hid_p) * tk * wsz + act

    def launch(use_pm):
        tm_e = tm0
        while True:
            tk, n_k, vmem_needed = plan(tm_e, use_pm)
            if vmem_needed <= budget or tm_e <= 128:
                break
            tm_e = max(128, _round_up(tm_e // 2, row_align))

        resident = n_k == 1

        def spec(shape, imap, constant=False):
            if constant and use_pm:
                return pl.BlockSpec(shape, imap, pipeline_mode=pl.Buffered(1))
            return pl.BlockSpec(shape, imap)

        if resident:
            grid = (pl.cdiv(M, tm_e),)
            in_specs = [
                spec((tm_e, in_p), lambda i: (i, 0)),                     # x tile
                spec((in_p, hid_p), lambda i: (0, 0), constant=True),     # W1
                spec((1, hid_p), lambda i: (0, 0), constant=True),        # b1
                spec((hid_p, hid_p), lambda i: (0, 0), constant=True),    # W2
                spec((3, hid_p), lambda i: (0, 0), constant=True),        # b2/gamma/beta
            ]
            out_spec = pl.BlockSpec((tm_e, hid_p), lambda i: (i, 0))
            scratch = ()
            semantics = ("parallel",)
        else:
            grid = (pl.cdiv(M, tm_e), n_k)
            in_specs = [
                spec((tm_e, in_p), lambda i, k: (i, 0)),                  # x tile
                spec((in_p, tk), lambda i, k: (0, k)),                    # W1 cols chunk
                spec((1, tk), lambda i, k: (0, k)),                       # b1 chunk
                spec((tk, hid_p), lambda i, k: (k, 0)),                   # W2 rows chunk
                spec((3, hid_p), lambda i, k: (0, 0), constant=True),     # b2/gamma/beta
            ]
            out_spec = pl.BlockSpec((tm_e, hid_p), lambda i, k: (i, 0))
            scratch = (pltpu.VMEM((tm_e, hid_p), jnp.float32),)
            semantics = ("parallel", "arbitrary")

        flops = 2 * M * hid_p * (in_p + hid_p) + 10 * M * hid_p
        bytes_accessed = (M * (in_p + hid_p) * dsz
                          + (in_p + hid_p) * hid_p * wsz + 4 * hid_p * 4)
        cost = pl.CostEstimate(flops=int(flops), transcendentals=int(M),
                               bytes_accessed=int(bytes_accessed))
        vmem_limit = int(min(phys_vmem - (8 << 20),
                             max(vmem_needed + (4 << 20), 32 << 20)))

        return pl.pallas_call(
            _make_kernel(hid, hid_p, n_k, use_acc=not resident),
            out_shape=jax.ShapeDtypeStruct((M, hid_p), x.dtype),
            grid_spec=pltpu.PrefetchScalarGridSpec(
                num_scalar_prefetch=0,
                grid=grid,
                in_specs=in_specs,
                out_specs=out_spec,
                scratch_shapes=scratch),
            compiler_params=pltpu.CompilerParams(
                dimension_semantics=semantics,
                vmem_limit_bytes=vmem_limit),
            cost_estimate=cost,
        )(x2d, w1, b1, w2, epi)

    prefer_pm = hasattr(pl, "Buffered")
    try:
        out = jax.block_until_ready(launch(prefer_pm))
    except Exception:
        if not prefer_pm:
            raise
        out = launch(False)          # retry without pipeline_mode hints

    if hid_p != hid:
        out = out[:, :hid]
    return out.reshape(*lead, hid)


def encoder_block_ref(x, w1, b1, w2, b2, gamma, beta):
    h = jnp.maximum(x @ w1 + b1, 0.0)
    y = h @ w2 + b2
    mean = jnp.mean(y, axis=-1, keepdims=True)
    var = jnp.mean((y - mean) ** 2, axis=-1, keepdims=True)
    return (y - mean) / jnp.sqrt(var + LN_EPS) * gamma + beta


if __name__ == "__main__":
    # Small shapes: batch=2, seq=8, in_dim=32, hid_dim=32
    batch, seq, in_dim, hid_dim = 2, 8, 32, 32

    key = jax.random.PRNGKey(0)
    kx, k1, k2, k3, k4 = jax.random.split(key, 5)

    x = jax.random.normal(kx, (batch, seq, in_dim), dtype=jnp.float32)

    # Deterministic parameter init (PyTorch nn.Linear weights are (out,in);
    # stored transposed as (in,out) so the kernel does x @ W directly).
    w1 = jax.random.normal(k1, (in_dim, hid_dim), dtype=jnp.float32) * 0.1
    b1 = jax.random.normal(k2, (hid_dim,), dtype=jnp.float32) * 0.1
    w2 = jax.random.normal(k3, (hid_dim, hid_dim), dtype=jnp.float32) * 0.1
    b2 = jax.random.normal(k4, (hid_dim,), dtype=jnp.float32) * 0.1
    gamma = jnp.ones((hid_dim,), dtype=jnp.float32)   # nn.LayerNorm default
    beta = jnp.zeros((hid_dim,), dtype=jnp.float32)   # nn.LayerNorm default

    out = encoder_block(x, w1, b1, w2, b2, gamma, beta)
    out = jax.block_until_ready(out)

    ref = encoder_block_ref(x, w1, b1, w2, b2, gamma, beta)
    assert out.shape == (batch, seq, hid_dim)
    assert jnp.allclose(out, ref, atol=2e-5, rtol=2e-5), "mismatch vs reference"

    print("KERNEL_OK")
</pallas_src>

<mosaic_0001>
module attributes {stable_mosaic.version = 11 : i64} {
  func.func @kernel(%arg0: i32, %arg1: memref<16x128xf32, #tpu.memory_space<vmem>>, %arg2: memref<128x128xf32, #tpu.memory_space<vmem>>, %arg3: memref<1x128xf32, #tpu.memory_space<vmem>>, %arg4: memref<128x128xf32, #tpu.memory_space<vmem>>, %arg5: memref<3x128xf32, #tpu.memory_space<vmem>>, %arg6: memref<16x128xf32, #tpu.memory_space<vmem>>) attributes {dimension_semantics = [#tpu.dimension_semantics<parallel>], iteration_bounds = array<i64: 1>, scalar_prefetch = 0 : i64, scratch_operands = 0 : i64, tpu.core_type = #tpu.core_type<tc>, window_params = [{transform_indices = @transform_0, window_bounds = array<i64: 16, 128>}, {pipeline_mode = #tpu.pipeline_mode<synchronous>, transform_indices = @transform_1, window_bounds = array<i64: 128, 128>}, {pipeline_mode = #tpu.pipeline_mode<synchronous>, transform_indices = @transform_2, window_bounds = array<i64: 1, 128>}, {pipeline_mode = #tpu.pipeline_mode<synchronous>, transform_indices = @transform_3, window_bounds = array<i64: 128, 128>}, {pipeline_mode = #tpu.pipeline_mode<synchronous>, transform_indices = @transform_4, window_bounds = array<i64: 3, 128>}, {transform_indices = @transform_5, window_bounds = array<i64: 16, 128>}]} {
    %c0 = arith.constant 0 : index
    %c0_0 = arith.constant 0 : index
    %0 = vector.load %arg1[%c0, %c0_0] : memref<16x128xf32, #tpu.memory_space<vmem>>, vector<16x128xf32>
    %c0_1 = arith.constant 0 : index
    %c0_2 = arith.constant 0 : index
    %1 = vector.load %arg2[%c0_1, %c0_2] : memref<128x128xf32, #tpu.memory_space<vmem>>, vector<128x128xf32>
    %cst = arith.constant dense<0.000000e+00> : vector<16x128xf32>
    %2 = tpu.matmul %0, %1, %cst {dimension_numbers = #tpu.dot_dimension_numbers<[1], [0], [0], [1], [0, 0, 1, 1], [], []>} : vector<16x128xf32>, vector<128x128xf32>, vector<16x128xf32> -> vector<16x128xf32>
    %c0_3 = arith.constant 0 : index
    %c0_4 = arith.constant 0 : index
    %3 = vector.load %arg3[%c0_3, %c0_4] : memref<1x128xf32, #tpu.memory_space<vmem>>, vector<1x128xf32>
    %4 = vector.broadcast %3 : vector<1x128xf32> to vector<16x128xf32>
    %5 = arith.addf %2, %4 : vector<16x128xf32>
    %cst_5 = arith.constant 0.000000e+00 : f32
    %6 = vector.broadcast %cst_5 : f32 to vector<16x128xf32>
    %7 = arith.maximumf %5, %6 : vector<16x128xf32>
    %c0_6 = arith.constant 0 : index
    %c0_7 = arith.constant 0 : index
    %8 = vector.load %arg4[%c0_6, %c0_7] : memref<128x128xf32, #tpu.memory_space<vmem>>, vector<128x128xf32>
    %cst_8 = arith.constant dense<0.000000e+00> : vector<16x128xf32>
    %9 = tpu.matmul %7, %8, %cst_8 {dimension_numbers = #tpu.dot_dimension_numbers<[1], [0], [0], [1], [0, 0, 1, 1], [], []>} : vector<16x128xf32>, vector<128x128xf32>, vector<16x128xf32> -> vector<16x128xf32>
    %c0_9 = arith.constant 0 : index
    %c0_10 = arith.constant 0 : index
    %10 = vector.load %arg5[%c0_9, %c0_10] : memref<3x128xf32, #tpu.memory_space<vmem>>, vector<1x128xf32>
    %11 = vector.broadcast %10 : vector<1x128xf32> to vector<16x128xf32>
    %12 = arith.addf %9, %11 : vector<16x128xf32>
    %cst_11 = arith.constant dense<0.000000e+00> : vector<16xf32>
    %13 = vector.multi_reduction <add>, %12, %cst_11 [1] : vector<16x128xf32> to vector<16xf32>
    %14 = vector.shape_cast %13 : vector<16xf32> to vector<16x1xf32>
    %cst_12 = arith.constant 3.125000e-02 : f32
    %15 = vector.broadcast %cst_12 : f32 to vector<16x1xf32>
    %16 = arith.mulf %14, %15 : vector<16x1xf32>
    %17 = vector.broadcast %16 : vector<16x1xf32> to vector<16x128xf32>
    %18 = arith.subf %12, %17 : vector<16x128xf32>
    %19 = tpu.iota {dimensions = array<i32: 1>} : vector<16x128xi32>
    %c32_i32 = arith.constant 32 : i32
    %20 = vector.broadcast %c32_i32 : i32 to vector<16x128xi32>
    %21 = arith.cmpi slt, %19, %20 : vector<16x128xi32>
    %cst_13 = arith.constant 0.000000e+00 : f32
    %22 = vector.broadcast %cst_13 : f32 to vector<16x128xf32>
    %23 = arith.select %21, %18, %22 : vector<16x128xi1>, vector<16x128xf32>
    %24 = arith.mulf %23, %23 : vector<16x128xf32>
    %cst_14 = arith.constant dense<0.000000e+00> : vector<16xf32>
    %25 = vector.multi_reduction <add>, %24, %cst_14 [1] : vector<16x128xf32> to vector<16xf32>
    %26 = vector.shape_cast %25 : vector<16xf32> to vector<16x1xf32>
    %cst_15 = arith.constant 3.125000e-02 : f32
    %27 = vector.broadcast %cst_15 : f32 to vector<16x1xf32>
    %28 = arith.mulf %26, %27 : vector<16x1xf32>
    %cst_16 = arith.constant 9.99999974E-6 : f32
    %29 = vector.broadcast %cst_16 : f32 to vector<16x1xf32>
    %30 = arith.addf %28, %29 : vector<16x1xf32>
    %31 = math.rsqrt %30 : vector<16x1xf32>
    %32 = vector.broadcast %31 : vector<16x1xf32> to vector<16x128xf32>
    %33 = arith.mulf %23, %32 : vector<16x128xf32>
    %c1 = arith.constant 1 : index
    %c0_17 = arith.constant 0 : index
    %34 = vector.load %arg5[%c1, %c0_17] : memref<3x128xf32, #tpu.memory_space<vmem>>, vector<1x128xf32>
    %35 = vector.broadcast %34 : vector<1x128xf32> to vector<16x128xf32>
    %36 = arith.mulf %33, %35 : vector<16x128xf32>
    %c2 = arith.constant 2 : index
    %c0_18 = arith.constant 0 : index
    %37 = vector.load %arg5[%c2, %c0_18] : memref<3x128xf32, #tpu.memory_space<vmem>>, vector<1x128xf32>
    %38 = vector.broadcast %37 : vector<1x128xf32> to vector<16x128xf32>
    %39 = arith.addf %36, %38 : vector<16x128xf32>
    %c0_19 = arith.constant 0 : index
    %c0_20 = arith.constant 0 : index
    %40 = vector.load %arg6[%c0_19, %c0_20] : memref<16x128xf32, #tpu.memory_space<vmem>>, vector<16x128xf32>
    tpu.vector_store %arg6[%c0_19, %c0_20], %39 {strides = array<i32>} : memref<16x128xf32, #tpu.memory_space<vmem>>, vector<16x128xf32>,
    return
  }
  func.func @transform_0(%arg0: i32) -> (i32, i32) {
    %c0_i32 = arith.constant 0 : i32
    %c0_i32_0 = arith.constant 0 : i32
    return %arg0, %c0_i32 : i32, i32
  }
  func.func @transform_1(%arg0: i32) -> (i32, i32) {
    %c0_i32 = arith.constant 0 : i32
    %c0_i32_0 = arith.constant 0 : i32
    %c0_i32_1 = arith.constant 0 : i32
    return %c0_i32, %c0_i32_0 : i32, i32
  }
  func.func @transform_2(%arg0: i32) -> (i32, i32) {
    %c0_i32 = arith.constant 0 : i32
    %c0_i32_0 = arith.constant 0 : i32
    %c0_i32_1 = arith.constant 0 : i32
    return %c0_i32, %c0_i32_0 : i32, i32
  }
  func.func @transform_3(%arg0: i32) -> (i32, i32) {
    %c0_i32 = arith.constant 0 : i32
    %c0_i32_0 = arith.constant 0 : i32
    %c0_i32_1 = arith.constant 0 : i32
    return %c0_i32, %c0_i32_0 : i32, i32
  }
  func.func @transform_4(%arg0: i32) -> (i32, i32) {
    %c0_i32 = arith.constant 0 : i32
    %c0_i32_0 = arith.constant 0 : i32
    %c0_i32_1 = arith.constant 0 : i32
    return %c0_i32, %c0_i32_0 : i32, i32
  }
  func.func @transform_5(%arg0: i32) -> (i32, i32) {
    %c0_i32 = arith.constant 0 : i32
    %c0_i32_0 = arith.constant 0 : i32
    return %arg0, %c0_i32 : i32, i32
  }
}

module attributes {stable_mosaic.version = 11 : i64} {
  func.func @kernel(%arg0: i32, %arg1: memref<16x128xf32, #tpu.memory_space<vmem>>, %arg2: memref<128x128xf32, #tpu.memory_space<vmem>>, %arg3: memref<1x128xf32, #tpu.memory_space<vmem>>, %arg4: memref<128x128xf32, #tpu.memory_space<vmem>>, %arg5: memref<3x128xf32, #tpu.memory_space<vmem>>, %arg6: memref<16x128xf32, #tpu.memory_space<vmem>>) attributes {dimension_semantics = [#tpu.dimension_semantics<parallel>], iteration_bounds = array<i64: 1>, scalar_prefetch = 0 : i64, scratch_operands = 0 : i64, tpu.core_type = #tpu.core_type<tc>, window_params = [{transform_indices = @transform_0, window_bounds = array<i64: 16, 128>}, {pipeline_mode = #tpu.pipeline_mode<synchronous>, transform_indices = @transform_1, window_bounds = array<i64: 128, 128>}, {pipeline_mode = #tpu.pipeline_mode<synchronous>, transform_indices = @transform_2, window_bounds = array<i64: 1, 128>}, {pipeline_mode = #tpu.pipeline_mode<synchronous>, transform_indices = @transform_3, window_bounds = array<i64: 128, 128>}, {pipeline_mode = #tpu.pipeline_mode<synchronous>, transform_indices = @transform_4, window_bounds = array<i64: 3, 128>}, {transform_indices = @transform_5, window_bounds = array<i64: 16, 128>}]} {
    %c0 = arith.constant 0 : index
    %c0_0 = arith.constant 0 : index
    %0 = vector.load %arg1[%c0, %c0_0] : memref<16x128xf32, #tpu.memory_space<vmem>>, vector<16x128xf32>
    %c0_1 = arith.constant 0 : index
    %c0_2 = arith.constant 0 : index
    %1 = vector.load %arg2[%c0_1, %c0_2] : memref<128x128xf32, #tpu.memory_space<vmem>>, vector<128x128xf32>
    %cst = arith.constant dense<0.000000e+00> : vector<16x128xf32>
    %2 = tpu.matmul %0, %1, %cst {dimension_numbers = #tpu.dot_dimension_numbers<[1], [0], [0], [1], [0, 0, 1, 1], [], []>} : vector<16x128xf32>, vector<128x128xf32>, vector<16x128xf32> -> vector<16x128xf32>
    %c0_3 = arith.constant 0 : index
    %c0_4 = arith.constant 0 : index
    %3 = vector.load %arg3[%c0_3, %c0_4] : memref<1x128xf32, #tpu.memory_space<vmem>>, vector<1x128xf32>
    %4 = vector.broadcast %3 : vector<1x128xf32> to vector<16x128xf32>
    %5 = arith.addf %2, %4 : vector<16x128xf32>
    %cst_5 = arith.constant 0.000000e+00 : f32
    %6 = vector.broadcast %cst_5 : f32 to vector<16x128xf32>
    %7 = arith.maximumf %5, %6 : vector<16x128xf32>
    %c0_6 = arith.constant 0 : index
    %c0_7 = arith.constant 0 : index
    %8 = vector.load %arg4[%c0_6, %c0_7] : memref<128x128xf32, #tpu.memory_space<vmem>>, vector<128x128xf32>
    %cst_8 = arith.constant dense<0.000000e+00> : vector<16x128xf32>
    %9 = tpu.matmul %7, %8, %cst_8 {dimension_numbers = #tpu.dot_dimension_numbers<[1], [0], [0], [1], [0, 0, 1, 1], [], []>} : vector<16x128xf32>, vector<128x128xf32>, vector<16x128xf32> -> vector<16x128xf32>
    %c0_9 = arith.constant 0 : index
    %c0_10 = arith.constant 0 : index
    %10 = vector.load %arg5[%c0_9, %c0_10] : memref<3x128xf32, #tpu.memory_space<vmem>>, vector<1x128xf32>
    %11 = vector.broadcast %10 : vector<1x128xf32> to vector<16x128xf32>
    %12 = arith.addf %9, %11 : vector<16x128xf32>
    %cst_11 = arith.constant dense<0.000000e+00> : vector<16xf32>
    %13 = vector.multi_reduction <add>, %12, %cst_11 [1] : vector<16x128xf32> to vector<16xf32>
    %14 = vector.shape_cast %13 : vector<16xf32> to vector<16x1xf32>
    %cst_12 = arith.constant 3.125000e-02 : f32
    %15 = vector.broadcast %cst_12 : f32 to vector<16x1xf32>
    %16 = arith.mulf %14, %15 : vector<16x1xf32>
    %17 = vector.broadcast %16 : vector<16x1xf32> to vector<16x128xf32>
    %18 = arith.subf %12, %17 : vector<16x128xf32>
    %19 = tpu.iota {dimensions = array<i32: 1>} : vector<16x128xi32>
    %c32_i32 = arith.constant 32 : i32
    %20 = vector.broadcast %c32_i32 : i32 to vector<16x128xi32>
    %21 = arith.cmpi slt, %19, %20 : vector<16x128xi32>
    %cst_13 = arith.constant 0.000000e+00 : f32
    %22 = vector.broadcast %cst_13 : f32 to vector<16x128xf32>
    %23 = arith.select %21, %18, %22 : vector<16x128xi1>, vector<16x128xf32>
    %24 = arith.mulf %23, %23 : vector<16x128xf32>
    %cst_14 = arith.constant dense<0.000000e+00> : vector<16xf32>
    %25 = vector.multi_reduction <add>, %24, %cst_14 [1] : vector<16x128xf32> to vector<16xf32>
    %26 = vector.shape_cast %25 : vector<16xf32> to vector<16x1xf32>
    %cst_15 = arith.constant 3.125000e-02 : f32
    %27 = vector.broadcast %cst_15 : f32 to vector<16x1xf32>
    %28 = arith.mulf %26, %27 : vector<16x1xf32>
    %cst_16 = arith.constant 9.99999974E-6 : f32
    %29 = vector.broadcast %cst_16 : f32 to vector<16x1xf32>
    %30 = arith.addf %28, %29 : vector<16x1xf32>
    %31 = math.rsqrt %30 : vector<16x1xf32>
    %32 = vector.broadcast %31 : vector<16x1xf32> to vector<16x128xf32>
    %33 = arith.mulf %23, %32 : vector<16x128xf32>
    %c1 = arith.constant 1 : index
    %c0_17 = arith.constant 0 : index
    %34 = vector.load %arg5[%c1, %c0_17] : memref<3x128xf32, #tpu.memory_space<vmem>>, vector<1x128xf32>
    %35 = vector.broadcast %34 : vector<1x128xf32> to vector<16x128xf32>
    %36 = arith.mulf %33, %35 : vector<16x128xf32>
    %c2 = arith.constant 2 : index
    %c0_18 = arith.constant 0 : index
    %37 = vector.load %arg5[%c2, %c0_18] : memref<3x128xf32, #tpu.memory_space<vmem>>, vector<1x128xf32>
    %38 = vector.broadcast %37 : vector<1x128xf32> to vector<16x128xf32>
    %39 = arith.addf %36, %38 : vector<16x128xf32>
    %c0_19 = arith.constant 0 : index
    %c0_20 = arith.constant 0 : index
    %40 = vector.load %arg6[%c0_19, %c0_20] : memref<16x128xf32, #tpu.memory_space<vmem>>, vector<16x128xf32>
    tpu.vector_store %arg6[%c0_19, %c0_20], %39 {strides = array<i32>} : memref<16x128xf32, #tpu.memory_space<vmem>>, vector<16x128xf32>,
    return
  }
  func.func @transform_0(%arg0: i32) -> (i32, i32) {
    %c0_i32 = arith.constant 0 : i32
    %c0_i32_0 = arith.constant 0 : i32
    return %arg0, %c0_i32 : i32, i32
  }
  func.func @transform_1(%arg0: i32) -> (i32, i32) {
    %c0_i32 = arith.constant 0 : i32
    %c0_i32_0 = arith.constant 0 : i32
    %c0_i32_1 = arith.constant 0 : i32
    return %c0_i32, %c0_i32_0 : i32, i32
  }
  func.func @transform_2(%arg0: i32) -> (i32, i32) {
    %c0_i32 = arith.constant 0 : i32
    %c0_i32_0 = arith.constant 0 : i32
    %c0_i32_1 = arith.constant 0 : i32
    return %c0_i32, %c0_i32_0 : i32, i32
  }
  func.func @transform_3(%arg0: i32) -> (i32, i32) {
    %c0_i32 = arith.constant 0 : i32
    %c0_i32_0 = arith.constant 0 : i32
    %c0_i32_1 = arith.constant 0 : i32
    return %c0_i32, %c0_i32_0 : i32, i32
  }
  func.func @transform_4(%arg0: i32) -> (i32, i32) {
    %c0_i32 = arith.constant 0 : i32
    %c0_i32_0 = arith.constant 0 : i32
    %c0_i32_1 = arith.constant 0 : i32
    return %c0_i32, %c0_i32_0 : i32, i32
  }
  func.func @transform_5(%arg0: i32) -> (i32, i32) {
    %c0_i32 = arith.constant 0 : i32
    %c0_i32_0 = arith.constant 0 : i32
    return %arg0, %c0_i32 : i32, i32
  }
}

</mosaic_0001>

<llo_original>
// kernel: tpu_custom_call.1
$region0: #{tpu_custom_call.1}
  #allocation0 [shape = 'u32[]', space=smem, size = 0x4, offset = 0x4, fixed_abs, tag = 'smem constant byte address 0x4 - core index']
  #allocation1 [shape = 'u32[72,128]{1,0:T(1,128)}', space=vmem, size = 0x9000, scoped, tag = 'internal scratch']
  %s0 = inlined_call_operand.hbm [shape: f32[16,128], index: 0, kind: input, shape index: {}]
  %s1 = inlined_call_operand.hbm [shape: f32[128,128], index: 1, kind: input, shape index: {}]
  %s2 = inlined_call_operand.vmem [shape: f32[1,128], index: 2, kind: input, shape index: {}]
  %s3 = inlined_call_operand.hbm [shape: f32[128,128], index: 3, kind: input, shape index: {}]
  %s4 = inlined_call_operand.hbm [shape: f32[3,128], index: 4, kind: input, shape index: {}]
  %s5 = inlined_call_operand.hbm [shape: f32[16,128], index: 5, kind: output, shape index: {}]
  %s6 = sld [smem:[#allocation0]]
  $region46: #{tpu_custom_call.1} parent=0
    _
  %s8 = ssub.s32 1, %s6
  %s9 = scalar_select 0, %s8, %s6
  $region1: #{tpu_custom_call.1} parent=0
    #allocation2 [shape = 'u8[8192]{0}', space=vmem, size = 0x2000, scoped, tag = 'input window, operand 0, single buffered']
    #allocation3 [shape = 's32[1]{0}', space=sflag, size = 0x4, scoped, tag = 'scoped memory for tpu_custom_call.1']
    #allocation4 [shape = 's32[1]{0}', space=sflag, size = 0x4, scoped, tag = 'scoped memory for tpu_custom_call.1']
    #allocation5 [shape = 'u8[65536]{0}', space=vmem, size = 0x10000, scoped, tag = 'input window, operand 1, single buffered']
    #allocation6 [shape = 's32[1]{0}', space=sflag, size = 0x4, scoped, tag = 'scoped memory for tpu_custom_call.1']
    #allocation7 [shape = 'u8[65536]{0}', space=vmem, size = 0x10000, scoped, tag = 'input window, operand 3, single buffered']
    #allocation8 [shape = 'u8[2048]{0}', space=vmem, size = 0x800, scoped, tag = 'input window, operand 4, single buffered']
    #allocation9 [shape = 's32[1]{0}', space=sflag, size = 0x4, scoped, tag = 'scoped memory for tpu_custom_call.1']
    #allocation10 [shape = 'u8[8192]{0}', space=vmem, size = 0x2000, scoped, tag = 'output window, operand 0, single buffered']
    %10 = vsyncpa [#allocation3], 0
    %11 = vsyncpa [#allocation6], 0
    %12 = vsyncpa [#allocation9], 0
    %13 = vsyncpa [#allocation4], 0
    // Predicated region
    $region2: #{tpu_custom_call.1} parent=1 // pred_check
      _
    $region3: #{tpu_custom_call.1} parent=1 // pred_check_branch
      %15 = sbr.rel (0) target = $region5
    $region4: #{tpu_custom_call.1} parent=1 // pred_region
      %17 = vsyncadd [#allocation3], 0
      %s18 = sshll.u32 %s0, 4
      %s19 = int_to_ptr.hbm [resolvable:$true] %s18
      %s20 = sshll.u32 [#allocation2], 4
      %s21 = int_to_ptr.vmem [resolvable:$true] %s20
      %26 = dma.hbm_to_vmem [thread:$0]  %s19, 256, %s21, [#allocation3], 128, 128, 8
    $region5: #{tpu_custom_call.1} parent=1 // pred_fallthru
      _
    // Predicated region
    $region6: #{tpu_custom_call.1} parent=1 // pred_check
      _
    $region7: #{tpu_custom_call.1} parent=1 // pred_check_branch
      %28 = sbr.rel (0) target = $region9
    $region8: #{tpu_custom_call.1} parent=1 // pred_region
      %30 = vsyncadd [#allocation6], 0
      %s31 = sshll.u32 %s1, 4
      %s32 = int_to_ptr.hbm [resolvable:$true] %s31
      %s33 = sshll.u32 [#allocation5], 4
      %s34 = int_to_ptr.vmem [resolvable:$true] %s33
      %39 = dma.hbm_to_vmem [thread:$0]  %s32, 2048, %s34, [#allocation6], 128, 128, 8
    $region9: #{tpu_custom_call.1} parent=1 // pred_fallthru
      _
    // Predicated region
    $region10: #{tpu_custom_call.1} parent=1 // pred_check
      _
    $region11: #{tpu_custom_call.1} parent=1 // pred_check_branch
      %41 = sbr.rel (0) target = $region13
    $region12: #{tpu_custom_call.1} parent=1 // pred_region
      _
    $region13: #{tpu_custom_call.1} parent=1 // pred_fallthru
      _
    // Predicated region
    $region14: #{tpu_custom_call.1} parent=1 // pred_check
      _
    $region15: #{tpu_custom_call.1} parent=1 // pred_check_branch
      %43 = sbr.rel (0) target = $region17
    $region16: #{tpu_custom_call.1} parent=1 // pred_region
      %45 = vsyncadd [#allocation6], 0
      %s46 = sshll.u32 %s3, 4
      %s47 = int_to_ptr.hbm [resolvable:$true] %s46
      %s48 = sshll.u32 [#allocation7], 4
      %s49 = int_to_ptr.vmem [resolvable:$true] %s48
      %54 = dma.hbm_to_vmem [thread:$0]  %s47, 2048, %s49, [#allocation6], 128, 128, 8
    $region17: #{tpu_custom_call.1} parent=1 // pred_fallthru
      _
    // Predicated region
    $region18: #{tpu_custom_call.1} parent=1 // pred_check
      _
    $region19: #{tpu_custom_call.1} parent=1 // pred_check_branch
      %56 = sbr.rel (0) target = $region21
    $region20: #{tpu_custom_call.1} parent=1 // pred_region
      %58 = vsyncadd [#allocation9], 0
      %s60 = sshll.u32 %s4, 4
      %s61 = int_to_ptr.hbm [resolvable:$true] %s60
      %s62 = sshll.u32 [#allocation8], 4
      %s63 = int_to_ptr.vmem [resolvable:$true] %s62
      %65 = dma.hbm_to_vmem [thread:$0]  %s61, 64, %s63, [#allocation9]
    $region21: #{tpu_custom_call.1} parent=1 // pred_fallthru
      _
    // Predicated region
    $region22: #{tpu_custom_call.1} parent=1 // pred_check
      _
    $region23: #{tpu_custom_call.1} parent=1 // pred_check_branch
      %67 = sbr.rel (0) target = $region25
    $region24: #{tpu_custom_call.1} parent=1 // pred_region
      %69 = dma.done [#allocation3], 256
    $region25: #{tpu_custom_call.1} parent=1 // pred_fallthru
      _
    // Predicated region
    $region26: #{tpu_custom_call.1} parent=1 // pred_check
      _
    $region27: #{tpu_custom_call.1} parent=1 // pred_check_branch
      %71 = sbr.rel (0) target = $region29
    $region28: #{tpu_custom_call.1} parent=1 // pred_region
      %73 = dma.done [#allocation6], 2048
    $region29: #{tpu_custom_call.1} parent=1 // pred_fallthru
      _
    // Predicated region
    $region30: #{tpu_custom_call.1} parent=1 // pred_check
      _
    $region31: #{tpu_custom_call.1} parent=1 // pred_check_branch
      %75 = sbr.rel (0) target = $region33
    $region32: #{tpu_custom_call.1} parent=1 // pred_region
      %77 = dma.done [#allocation6], 2048
    $region33: #{tpu_custom_call.1} parent=1 // pred_fallthru
      _
    // Predicated region
    $region34: #{tpu_custom_call.1} parent=1 // pred_check
      _
    $region35: #{tpu_custom_call.1} parent=1 // pred_check_branch
      %79 = sbr.rel (0) target = $region37
    $region36: #{tpu_custom_call.1} parent=1 // pred_region
      %81 = dma.done [#allocation9], 64
    $region37: #{tpu_custom_call.1} parent=1 // pred_fallthru
      _
    %v82 = vld [vmem:[#allocation2] sm:$0xff]
    %v83 = vld [vmem:[#allocation2 + $0x8] sm:$0xff]
    %v84 = vld [vmem:[#allocation5] sm:$0xff]
    %v85 = vld [vmem:[#allocation5 + $0x8] sm:$0xff]
    %v86 = vld [vmem:[#allocation5 + $0x10] sm:$0xff]
    %v87 = vld [vmem:[#allocation5 + $0x18] sm:$0xff]
    %v88 = vld [vmem:[#allocation5 + $0x20] sm:$0xff]
    %v89 = vld [vmem:[#allocation5 + $0x28] sm:$0xff]
    %v90 = vld [vmem:[#allocation5 + $0x30] sm:$0xff]
    %v91 = vld [vmem:[#allocation5 + $0x38] sm:$0xff]
    %v92 = vld [vmem:[#allocation5 + $0x40] sm:$0xff]
    %v93 = vld [vmem:[#allocation5 + $0x48] sm:$0xff]
    %v94 = vld [vmem:[#allocation5 + $0x50] sm:$0xff]
    %v95 = vld [vmem:[#allocation5 + $0x58] sm:$0xff]
    %v96 = vld [vmem:[#allocation5 + $0x60] sm:$0xff]
    %v97 = vld [vmem:[#allocation5 + $0x68] sm:$0xff]
    %v98 = vld [vmem:[#allocation5 + $0x70] sm:$0xff]
    %v99 = vld [vmem:[#allocation5 + $0x78] sm:$0xff]
    %v100 = vld [vmem:[%s2] sm:$0x1]
    %v102 = vperm.slane %v100, 0
    %104 = vmatpush.msra.mxu0 %v99
    %105 = vmatpush.msra.mxu0 %v98
    %106 = vmatpush.msra.mxu0 %v97
    %107 = vmatpush.msra.mxu0 %v96
    %108 = vmatpush.msra.mxu0 %v95
    %109 = vmatpush.msra.mxu0 %v94
    %110 = vmatpush.msra.mxu0 %v93
    %111 = vmatpush.msra.mxu0 %v92
    %112 = vmatpush.msra.mxu0 %v91
    %113 = vmatpush.msra.mxu0 %v90
    %114 = vmatpush.msra.mxu0 %v89
    %115 = vmatpush.msra.mxu0 %v88
    %116 = vmatpush.msra.mxu0 %v87
    %117 = vmatpush.msra.mxu0 %v86
    %118 = vmatpush.msra.mxu0 %v85
    %119 = vmatpush.msra.mxu0 %v84
    %120 = vmatmul.f32.gmra.mxu0 %v82
    %v121 = vpop.f32.mrf.mxu0
    %v122 = vadd.f32 %v102, %v121
    %123 = vmatmul.f32.gmra.mxu0 %v83
    %v124 = vpop.f32.mrf.mxu0
    %v125 = vadd.f32 %v102, %v124
    %126 = vdwg.mxu0
    %v127 = vmax.f32 %v122, 0.0
    %v128 = vmax.f32 %v125, 0.0
    %v129 = vld [vmem:[#allocation7] sm:$0xff]
    %v130 = vld [vmem:[#allocation7 + $0x8] sm:$0xff]
    %v131 = vld [vmem:[#allocation7 + $0x10] sm:$0xff]
    %v132 = vld [vmem:[#allocation7 + $0x18] sm:$0xff]
    %v133 = vld [vmem:[#allocation7 + $0x20] sm:$0xff]
    %v134 = vld [vmem:[#allocation7 + $0x28] sm:$0xff]
    %v135 = vld [vmem:[#allocation7 + $0x30] sm:$0xff]
    %v136 = vld [vmem:[#allocation7 + $0x38] sm:$0xff]
    %v137 = vld [vmem:[#allocation7 + $0x40] sm:$0xff]
    %v138 = vld [vmem:[#allocation7 + $0x48] sm:$0xff]
    %v139 = vld [vmem:[#allocation7 + $0x50] sm:$0xff]
    %v140 = vld [vmem:[#allocation7 + $0x58] sm:$0xff]
    %v141 = vld [vmem:[#allocation7 + $0x60] sm:$0xff]
    %v142 = vld [vmem:[#allocation7 + $0x68] sm:$0xff]
    %v143 = vld [vmem:[#allocation7 + $0x70] sm:$0xff]
    %v144 = vld [vmem:[#allocation7 + $0x78] sm:$0xff]
    %v145 = vld [vmem:[#allocation8] sm:$0x1]
    %v146 = vperm.slane %v145, 0
    %147 = vmatpush.msra.mxu0 %v144
    %148 = vmatpush.msra.mxu0 %v143
    %149 = vmatpush.msra.mxu0 %v142
    %150 = vmatpush.msra.mxu0 %v141
    %151 = vmatpush.msra.mxu0 %v140
    %152 = vmatpush.msra.mxu0 %v139
    %153 = vmatpush.msra.mxu0 %v138
    %154 = vmatpush.msra.mxu0 %v137
    %155 = vmatpush.msra.mxu0 %v136
    %156 = vmatpush.msra.mxu0 %v135
    %157 = vmatpush.msra.mxu0 %v134
    %158 = vmatpush.msra.mxu0 %v133
    %159 = vmatpush.msra.mxu0 %v132
    %160 = vmatpush.msra.mxu0 %v131
    %161 = vmatpush.msra.mxu0 %v130
    %162 = vmatpush.msra.mxu0 %v129
    %163 = vmatmul.f32.gmra.mxu0 %v127
    %v164 = vpop.f32.mrf.mxu0
    %v165 = vadd.f32 %v146, %v164
    %166 = vmatmul.f32.gmra.mxu0 %v128
    %v167 = vpop.f32.mrf.mxu0
    %v168 = vadd.f32 %v146, %v167
    %169 = vdwg.mxu0
    %170 = vadd.xlane.f32.xlu0 %v165
    %v171 = vpop.xlane.xlu0 %170
    %172 = vadd.xlane.f32.xlu0 %v168
    %v173 = vpop.xlane.xlu0 %172
    %v174 = vmul.f32 %v171, 0.03125
    %v175 = vmul.f32 %v173, 0.03125
    %v176 = vsub.f32 %v165, %v174
    %v177 = vsub.f32 %v168, %v175
    %v178 = vlaneseq
    %v179 = vand.u32 %v178, 127
    %vm180 = vcmp.lt.s32.totalorder %v179, 32
    %v181 = vsel %vm180, %v176, 0.0
    %v182 = vsel %vm180, %v177, 0.0
    %v183 = vmul.f32 %v181, %v181
    %v184 = vmul.f32 %v182, %v182
    %185 = vadd.xlane.f32.xlu0 %v183
    %v186 = vpop.xlane.xlu0 %185
    %187 = vadd.xlane.f32.xlu0 %v184
    %v188 = vpop.xlane.xlu0 %187
    %v189 = vmul.f32 %v186, 0.03125
    %v190 = vmul.f32 %v188, 0.03125
    %v191 = vadd.f32 %v189, 1e-05
    %v192 = vadd.f32 %v190, 1e-05
    %v193 = vrsqrt.pop %v191
    %v194 = vmul.f32 %v193, %v191
    %v195 = vmul.f32 %v194, %v193
    %v196 = vmul.f32 0.5, %v195
    %v197 = vsub.f32 1.5, %v196
    %v198 = vmul.f32 %v193, %v197
    %vm199 = vweird.f32 %v191
    %vm200 = vweird.f32 %v193
    %vm201 = vmor %vm199, %vm200
    %v202 = vsel %vm201, %v193, %v198
    %v203 = vrsqrt.pop %v192
    %v204 = vmul.f32 %v203, %v192
    %v205 = vmul.f32 %v204, %v203
    %v206 = vmul.f32 0.5, %v205
    %v207 = vsub.f32 1.5, %v206
    %v208 = vmul.f32 %v203, %v207
    %vm209 = vweird.f32 %v192
    %vm210 = vweird.f32 %v203
    %vm211 = vmor %vm209, %vm210
    %v212 = vsel %vm211, %v203, %v208
    %v213 = vmul.f32 %v181, %v202
    %v214 = vmul.f32 %v182, %v212
    %v215 = vld [vmem:[#allocation8 + $0x1] sm:$0x1]
    %v216 = vperm.slane %v215, 0
    %v217 = vmul.f32 %v213, %v216
    %v218 = vmul.f32 %v214, %v216
    %v219 = vld [vmem:[#allocation8 + $0x2] sm:$0x1]
    %v220 = vperm.slane %v219, 0
    %v221 = vadd.f32 %v217, %v220
    %v222 = vadd.f32 %v218, %v220
    %223 = vst [vmem:[#allocation10] sm:$0xff] %v221
    %224 = vst [vmem:[#allocation10 + $0x8] sm:$0xff] %v222
    // Predicated region
    $region38: #{tpu_custom_call.1} parent=1 // pred_check
      _
    $region39: #{tpu_custom_call.1} parent=1 // pred_check_branch
      %226 = sbr.rel (0) target = $region41
    $region40: #{tpu_custom_call.1} parent=1 // pred_region
      %228 = vsyncadd [#allocation4], 0
      %s229 = sshll.u32 [#allocation10], 4
      %s230 = int_to_ptr.vmem [resolvable:$true] %s229
      %s231 = sshll.u32 %s5, 4
      %s232 = int_to_ptr.hbm [resolvable:$true] %s231
      %237 = dma.vmem_to_hbm [thread:$0]  %s230, 256, %s232, [#allocation4], 128, 128, 8
    $region41: #{tpu_custom_call.1} parent=1 // pred_fallthru
      _
    // Predicated region
    $region42: #{tpu_custom_call.1} parent=1 // pred_check
      _
    $region43: #{tpu_custom_call.1} parent=1 // pred_check_branch
      %239 = sbr.rel (0) target = $region45
    $region44: #{tpu_custom_call.1} parent=1 // pred_region
      %241 = dma.done [#allocation4], 256
    $region45: #{tpu_custom_call.1} parent=1 // pred_fallthru
      _
    %242 = vsyncpa [#allocation3], 1
    %243 = vsyncpa [#allocation6], 1
    %244 = vsyncpa [#allocation9], 1
    %245 = vsyncpa [#allocation4], 1

// kernel: tpu_custom_call.1
$region0: #{tpu_custom_call.1}
  #allocation0 [shape = 'u32[]', space=smem, size = 0x4, offset = 0x4, fixed_abs, tag = 'smem constant byte address 0x4 - core index']
  #allocation1 [shape = 'u32[72,128]{1,0:T(1,128)}', space=vmem, size = 0x9000, scoped, tag = 'internal scratch']
  %s0 = inlined_call_operand.hbm [shape: f32[16,128], index: 0, kind: input, shape index: {}]
  %s1 = inlined_call_operand.hbm [shape: f32[128,128], index: 1, kind: input, shape index: {}]
  %s2 = inlined_call_operand.vmem [shape: f32[1,128], index: 2, kind: input, shape index: {}]
  %s3 = inlined_call_operand.hbm [shape: f32[128,128], index: 3, kind: input, shape index: {}]
  %s4 = inlined_call_operand.hbm [shape: f32[3,128], index: 4, kind: input, shape index: {}]
  %s5 = inlined_call_operand.hbm [shape: f32[16,128], index: 5, kind: output, shape index: {}]
  %s6 = sld [smem:[#allocation0]]
  $region46: #{tpu_custom_call.1} parent=0
    _
  %s8 = ssub.s32 1, %s6
  %s9 = scalar_select 0, %s8, %s6
  $region1: #{tpu_custom_call.1} parent=0
    #allocation2 [shape = 'u8[8192]{0}', space=vmem, size = 0x2000, scoped, tag = 'input window, operand 0, single buffered']
    #allocation3 [shape = 's32[1]{0}', space=sflag, size = 0x4, scoped, tag = 'scoped memory for tpu_custom_call.1']
    #allocation4 [shape = 's32[1]{0}', space=sflag, size = 0x4, scoped, tag = 'scoped memory for tpu_custom_call.1']
    #allocation5 [shape = 'u8[65536]{0}', space=vmem, size = 0x10000, scoped, tag = 'input window, operand 1, single buffered']
    #allocation6 [shape = 's32[1]{0}', space=sflag, size = 0x4, scoped, tag = 'scoped memory for tpu_custom_call.1']
    #allocation7 [shape = 'u8[65536]{0}', space=vmem, size = 0x10000, scoped, tag = 'input window, operand 3, single buffered']
    #allocation8 [shape = 'u8[2048]{0}', space=vmem, size = 0x800, scoped, tag = 'input window, operand 4, single buffered']
    #allocation9 [shape = 's32[1]{0}', space=sflag, size = 0x4, scoped, tag = 'scoped memory for tpu_custom_call.1']
    #allocation10 [shape = 'u8[8192]{0}', space=vmem, size = 0x2000, scoped, tag = 'output window, operand 0, single buffered']
    %10 = vsyncpa [#allocation3], 0
    %11 = vsyncpa [#allocation6], 0
    %12 = vsyncpa [#allocation9], 0
    %13 = vsyncpa [#allocation4], 0
    // Predicated region
    $region2: #{tpu_custom_call.1} parent=1 // pred_check
      _
    $region3: #{tpu_custom_call.1} parent=1 // pred_check_branch
      %15 = sbr.rel (0) target = $region5
    $region4: #{tpu_custom_call.1} parent=1 // pred_region
      %17 = vsyncadd [#allocation3], 0
      %s18 = sshll.u32 %s0, 4
      %s19 = int_to_ptr.hbm [resolvable:$true] %s18
      %s20 = sshll.u32 [#allocation2], 4
      %s21 = int_to_ptr.vmem [resolvable:$true] %s20
      %26 = dma.hbm_to_vmem [thread:$0]  %s19, 256, %s21, [#allocation3], 128, 128, 8
    $region5: #{tpu_custom_call.1} parent=1 // pred_fallthru
      _
    // Predicated region
    $region6: #{tpu_custom_call.1} parent=1 // pred_check
      _
    $region7: #{tpu_custom_call.1} parent=1 // pred_check_branch
      %28 = sbr.rel (0) target = $region9
    $region8: #{tpu_custom_call.1} parent=1 // pred_region
      %30 = vsyncadd [#allocation6], 0
      %s31 = sshll.u32 %s1, 4
      %s32 = int_to_ptr.hbm [resolvable:$true] %s31
      %s33 = sshll.u32 [#allocation5], 4
      %s34 = int_to_ptr.vmem [resolvable:$true] %s33
      %39 = dma.hbm_to_vmem [thread:$0]  %s32, 2048, %s34, [#allocation6], 128, 128, 8
    $region9: #{tpu_custom_call.1} parent=1 // pred_fallthru
      _
    // Predicated region
    $region10: #{tpu_custom_call.1} parent=1 // pred_check
      _
    $region11: #{tpu_custom_call.1} parent=1 // pred_check_branch
      %41 = sbr.rel (0) target = $region13
    $region12: #{tpu_custom_call.1} parent=1 // pred_region
      _
    $region13: #{tpu_custom_call.1} parent=1 // pred_fallthru
      _
    // Predicated region
    $region14: #{tpu_custom_call.1} parent=1 // pred_check
      _
    $region15: #{tpu_custom_call.1} parent=1 // pred_check_branch
      %43 = sbr.rel (0) target = $region17
    $region16: #{tpu_custom_call.1} parent=1 // pred_region
      %45 = vsyncadd [#allocation6], 0
      %s46 = sshll.u32 %s3, 4
      %s47 = int_to_ptr.hbm [resolvable:$true] %s46
      %s48 = sshll.u32 [#allocation7], 4
      %s49 = int_to_ptr.vmem [resolvable:$true] %s48
      %54 = dma.hbm_to_vmem [thread:$0]  %s47, 2048, %s49, [#allocation6], 128, 128, 8
    $region17: #{tpu_custom_call.1} parent=1 // pred_fallthru
      _
    // Predicated region
    $region18: #{tpu_custom_call.1} parent=1 // pred_check
      _
    $region19: #{tpu_custom_call.1} parent=1 // pred_check_branch
      %56 = sbr.rel (0) target = $region21
    $region20: #{tpu_custom_call.1} parent=1 // pred_region
      %58 = vsyncadd [#allocation9], 0
      %s60 = sshll.u32 %s4, 4
      %s61 = int_to_ptr.hbm [resolvable:$true] %s60
      %s62 = sshll.u32 [#allocation8], 4
      %s63 = int_to_ptr.vmem [resolvable:$true] %s62
      %65 = dma.hbm_to_vmem [thread:$0]  %s61, 64, %s63, [#allocation9]
    $region21: #{tpu_custom_call.1} parent=1 // pred_fallthru
      _
    // Predicated region
    $region22: #{tpu_custom_call.1} parent=1 // pred_check
      _
    $region23: #{tpu_custom_call.1} parent=1 // pred_check_branch
      %67 = sbr.rel (0) target = $region25
    $region24: #{tpu_custom_call.1} parent=1 // pred_region
      %69 = dma.done [#allocation3], 256
    $region25: #{tpu_custom_call.1} parent=1 // pred_fallthru
      _
    // Predicated region
    $region26: #{tpu_custom_call.1} parent=1 // pred_check
      _
    $region27: #{tpu_custom_call.1} parent=1 // pred_check_branch
      %71 = sbr.rel (0) target = $region29
    $region28: #{tpu_custom_call.1} parent=1 // pred_region
      %73 = dma.done [#allocation6], 2048
    $region29: #{tpu_custom_call.1} parent=1 // pred_fallthru
      _
    // Predicated region
    $region30: #{tpu_custom_call.1} parent=1 // pred_check
      _
    $region31: #{tpu_custom_call.1} parent=1 // pred_check_branch
      %75 = sbr.rel (0) target = $region33
    $region32: #{tpu_custom_call.1} parent=1 // pred_region
      %77 = dma.done [#allocation6], 2048
    $region33: #{tpu_custom_call.1} parent=1 // pred_fallthru
      _
    // Predicated region
    $region34: #{tpu_custom_call.1} parent=1 // pred_check
      _
    $region35: #{tpu_custom_call.1} parent=1 // pred_check_branch
      %79 = sbr.rel (0) target = $region37
    $region36: #{tpu_custom_call.1} parent=1 // pred_region
      %81 = dma.done [#allocation9], 64
    $region37: #{tpu_custom_call.1} parent=1 // pred_fallthru
      _
    %v82 = vld [vmem:[#allocation2] sm:$0xff]
    %v83 = vld [vmem:[#allocation2 + $0x8] sm:$0xff]
    %v84 = vld [vmem:[#allocation5] sm:$0xff]
    %v85 = vld [vmem:[#allocation5 + $0x8] sm:$0xff]
    %v86 = vld [vmem:[#allocation5 + $0x10] sm:$0xff]
    %v87 = vld [vmem:[#allocation5 + $0x18] sm:$0xff]
    %v88 = vld [vmem:[#allocation5 + $0x20] sm:$0xff]
    %v89 = vld [vmem:[#allocation5 + $0x28] sm:$0xff]
    %v90 = vld [vmem:[#allocation5 + $0x30] sm:$0xff]
    %v91 = vld [vmem:[#allocation5 + $0x38] sm:$0xff]
    %v92 = vld [vmem:[#allocation5 + $0x40] sm:$0xff]
    %v93 = vld [vmem:[#allocation5 + $0x48] sm:$0xff]
    %v94 = vld [vmem:[#allocation5 + $0x50] sm:$0xff]
    %v95 = vld [vmem:[#allocation5 + $0x58] sm:$0xff]
    %v96 = vld [vmem:[#allocation5 + $0x60] sm:$0xff]
    %v97 = vld [vmem:[#allocation5 + $0x68] sm:$0xff]
    %v98 = vld [vmem:[#allocation5 + $0x70] sm:$0xff]
    %v99 = vld [vmem:[#allocation5 + $0x78] sm:$0xff]
    %v100 = vld [vmem:[%s2] sm:$0x1]
    %v102 = vperm.slane %v100, 0
    %104 = vmatpush.msra.mxu0 %v99
    %105 = vmatpush.msra.mxu0 %v98
    %106 = vmatpush.msra.mxu0 %v97
    %107 = vmatpush.msra.mxu0 %v96
    %108 = vmatpush.msra.mxu0 %v95
    %109 = vmatpush.msra.mxu0 %v94
    %110 = vmatpush.msra.mxu0 %v93
    %111 = vmatpush.msra.mxu0 %v92
    %112 = vmatpush.msra.mxu0 %v91
    %113 = vmatpush.msra.mxu0 %v90
    %114 = vmatpush.msra.mxu0 %v89
    %115 = vmatpush.msra.mxu0 %v88
    %116 = vmatpush.msra.mxu0 %v87
    %117 = vmatpush.msra.mxu0 %v86
    %118 = vmatpush.msra.mxu0 %v85
    %119 = vmatpush.msra.mxu0 %v84
    %120 = vmatmul.f32.gmra.mxu0 %v82
    %v121 = vpop.f32.mrf.mxu0
    %v122 = vadd.f32 %v102, %v121
    %123 = vmatmul.f32.gmra.mxu0 %v83
    %v124 = vpop.f32.mrf.mxu0
    %v125 = vadd.f32 %v102, %v124
    %126 = vdwg.mxu0
    %v127 = vmax.f32 %v122, 0.0
    %v128 = vmax.f32 %v125, 0.0
    %v129 = vld [vmem:[#allocation7] sm:$0xff]
    %v130 = vld [vmem:[#allocation7 + $0x8] sm:$0xff]
    %v131 = vld [vmem:[#allocation7 + $0x10] sm:$0xff]
    %v132 = vld [vmem:[#allocation7 + $0x18] sm:$0xff]
    %v133 = vld [vmem:[#allocation7 + $0x20] sm:$0xff]
    %v134 = vld [vmem:[#allocation7 + $0x28] sm:$0xff]
    %v135 = vld [vmem:[#allocation7 + $0x30] sm:$0xff]
    %v136 = vld [vmem:[#allocation7 + $0x38] sm:$0xff]
    %v137 = vld [vmem:[#allocation7 + $0x40] sm:$0xff]
    %v138 = vld [vmem:[#allocation7 + $0x48] sm:$0xff]
    %v139 = vld [vmem:[#allocation7 + $0x50] sm:$0xff]
    %v140 = vld [vmem:[#allocation7 + $0x58] sm:$0xff]
    %v141 = vld [vmem:[#allocation7 + $0x60] sm:$0xff]
    %v142 = vld [vmem:[#allocation7 + $0x68] sm:$0xff]
    %v143 = vld [vmem:[#allocation7 + $0x70] sm:$0xff]
    %v144 = vld [vmem:[#allocation7 + $0x78] sm:$0xff]
    %v145 = vld [vmem:[#allocation8] sm:$0x1]
    %v146 = vperm.slane %v145, 0
    %147 = vmatpush.msra.mxu0 %v144
    %148 = vmatpush.msra.mxu0 %v143
    %149 = vmatpush.msra.mxu0 %v142
    %150 = vmatpush.msra.mxu0 %v141
    %151 = vmatpush.msra.mxu0 %v140
    %152 = vmatpush.msra.mxu0 %v139
    %153 = vmatpush.msra.mxu0 %v138
    %154 = vmatpush.msra.mxu0 %v137
    %155 = vmatpush.msra.mxu0 %v136
    %156 = vmatpush.msra.mxu0 %v135
    %157 = vmatpush.msra.mxu0 %v134
    %158 = vmatpush.msra.mxu0 %v133
    %159 = vmatpush.msra.mxu0 %v132
    %160 = vmatpush.msra.mxu0 %v131
    %161 = vmatpush.msra.mxu0 %v130
    %162 = vmatpush.msra.mxu0 %v129
    %163 = vmatmul.f32.gmra.mxu0 %v127
    %v164 = vpop.f32.mrf.mxu0
    %v165 = vadd.f32 %v146, %v164
    %166 = vmatmul.f32.gmra.mxu0 %v128
    %v167 = vpop.f32.mrf.mxu0
    %v168 = vadd.f32 %v146, %v167
    %169 = vdwg.mxu0
    %170 = vadd.xlane.f32.xlu0 %v165
    %v171 = vpop.xlane.xlu0 %170
    %172 = vadd.xlane.f32.xlu0 %v168
    %v173 = vpop.xlane.xlu0 %172
    %v174 = vmul.f32 %v171, 0.03125
    %v175 = vmul.f32 %v173, 0.03125
    %v176 = vsub.f32 %v165, %v174
    %v177 = vsub.f32 %v168, %v175
    %v178 = vlaneseq
    %v179 = vand.u32 %v178, 127
    %vm180 = vcmp.lt.s32.totalorder %v179, 32
    %v181 = vsel %vm180, %v176, 0.0
    %v182 = vsel %vm180, %v177, 0.0
    %v183 = vmul.f32 %v181, %v181
    %v184 = vmul.f32 %v182, %v182
    %185 = vadd.xlane.f32.xlu0 %v183
    %v186 = vpop.xlane.xlu0 %185
    %187 = vadd.xlane.f32.xlu0 %v184
    %v188 = vpop.xlane.xlu0 %187
    %v189 = vmul.f32 %v186, 0.03125
    %v190 = vmul.f32 %v188, 0.03125
    %v191 = vadd.f32 %v189, 1e-05
    %v192 = vadd.f32 %v190, 1e-05
    %v193 = vrsqrt.pop %v191
    %v194 = vmul.f32 %v193, %v191
    %v195 = vmul.f32 %v194, %v193
    %v196 = vmul.f32 0.5, %v195
    %v197 = vsub.f32 1.5, %v196
    %v198 = vmul.f32 %v193, %v197
    %vm199 = vweird.f32 %v191
    %vm200 = vweird.f32 %v193
    %vm201 = vmor %vm199, %vm200
    %v202 = vsel %vm201, %v193, %v198
    %v203 = vrsqrt.pop %v192
    %v204 = vmul.f32 %v203, %v192
    %v205 = vmul.f32 %v204, %v203
    %v206 = vmul.f32 0.5, %v205
    %v207 = vsub.f32 1.5, %v206
    %v208 = vmul.f32 %v203, %v207
    %vm209 = vweird.f32 %v192
    %vm210 = vweird.f32 %v203
    %vm211 = vmor %vm209, %vm210
    %v212 = vsel %vm211, %v203, %v208
    %v213 = vmul.f32 %v181, %v202
    %v214 = vmul.f32 %v182, %v212
    %v215 = vld [vmem:[#allocation8 + $0x1] sm:$0x1]
    %v216 = vperm.slane %v215, 0
    %v217 = vmul.f32 %v213, %v216
    %v218 = vmul.f32 %v214, %v216
    %v219 = vld [vmem:[#allocation8 + $0x2] sm:$0x1]
    %v220 = vperm.slane %v219, 0
    %v221 = vadd.f32 %v217, %v220
    %v222 = vadd.f32 %v218, %v220
    %223 = vst [vmem:[#allocation10] sm:$0xff] %v221
    %224 = vst [vmem:[#allocation10 + $0x8] sm:$0xff] %v222
    // Predicated region
    $region38: #{tpu_custom_call.1} parent=1 // pred_check
      _
    $region39: #{tpu_custom_call.1} parent=1 // pred_check_branch
      %226 = sbr.rel (0) target = $region41
    $region40: #{tpu_custom_call.1} parent=1 // pred_region
      %228 = vsyncadd [#allocation4], 0
      %s229 = sshll.u32 [#allocation10], 4
      %s230 = int_to_ptr.vmem [resolvable:$true] %s229
      %s231 = sshll.u32 %s5, 4
      %s232 = int_to_ptr.hbm [resolvable:$true] %s231
      %237 = dma.vmem_to_hbm [thread:$0]  %s230, 256, %s232, [#allocation4], 128, 128, 8
    $region41: #{tpu_custom_call.1} parent=1 // pred_fallthru
      _
    // Predicated region
    $region42: #{tpu_custom_call.1} parent=1 // pred_check
      _
    $region43: #{tpu_custom_call.1} parent=1 // pred_check_branch
      %239 = sbr.rel (0) target = $region45
    $region44: #{tpu_custom_call.1} parent=1 // pred_region
      %241 = dma.done [#allocation4], 256
    $region45: #{tpu_custom_call.1} parent=1 // pred_fallthru
      _
    %242 = vsyncpa [#allocation3], 1
    %243 = vsyncpa [#allocation6], 1
    %244 = vsyncpa [#allocation9], 1
    %245 = vsyncpa [#allocation4], 1

</llo_original>
